<compile_context>
chip_gen: v7x
topology: tpu7x:2x2x1
jax: 0.10.0
libtpu: 0.0.40
codegen_flags: <defaults>
</compile_context>

<pallas_src>
import math

import jax
import jax.numpy as jnp
from jax.experimental import pallas as pl
from jax.experimental.pallas import tpu as pltpu


def _round_up(x, m):
    return ((x + m - 1) // m) * m


# ---------------------------------------------------------------------------
# Kernel 1: H = seq @ W^T   (projection into the embedding space)
# ---------------------------------------------------------------------------
def _proj_kernel(seq_ref, w_ref, h_ref):
    # seq_ref: (tn, input_dim) bf16, w_ref: (input_dim, E) bf16 -> h_ref: (tn, E) bf16
    h = jnp.dot(seq_ref[...], w_ref[...], preferred_element_type=jnp.float32)
    h_ref[...] = h.astype(h_ref.dtype)


# ---------------------------------------------------------------------------
# Kernel 2: out = ReLU(adj @ H), K-tiled over the contraction (adj columns)
# ---------------------------------------------------------------------------
def _aggr_kernel(adj_ref, h_ref, out_ref, acc_ref):
    k = pl.program_id(1)

    @pl.when(k == 0)
    def _():
        acc_ref[...] = jnp.zeros_like(acc_ref)

    acc_ref[...] += jnp.dot(adj_ref[...], h_ref[...],
                            preferred_element_type=jnp.float32)

    @pl.when(k == pl.num_programs(1) - 1)
    def _():
        out_ref[...] = jnp.maximum(acc_ref[...], 0.0).astype(out_ref.dtype)


def aggr_forward(seq, adj, w, *, tm=256, tk=512,
                 compute_dtype=jnp.bfloat16, out_dtype=jnp.float32):
    """ReLU(adj @ seq @ w.T).

    seq: (N, input_dim) node features
    adj: (N, N)         dense adjacency
    w:   (embed_dim, input_dim)  nn.Linear weight (PyTorch layout, no bias)
    returns (N, embed_dim) in `out_dtype`.
    """
    N, input_dim = seq.shape
    embed_dim = w.shape[0]

    # ---- tile sizes (MXU/lane friendly, capped by problem size) ----
    # Multiples of 16 keep bf16 sublane packing unmasked; lane dims padded to 128.
    tm = min(tm, _round_up(N, 16))        # row tile of adj / out
    tk = min(tk, _round_up(N, 16))        # contraction tile (adj cols / H rows)
    Nr = _round_up(N, tm)                 # padded row count
    Nk = _round_up(N, tk)                 # padded contraction count
    E = _round_up(embed_dim, 128)         # lane-dense output width

    # ---- pad + cast operands (bf16 MXU operands, f32 accumulation) ----
    adj_p = jnp.pad(adj, ((0, Nr - N), (0, Nk - N))).astype(compute_dtype)
    seq_p = jnp.pad(seq, ((0, Nk - N), (0, 0))).astype(compute_dtype)
    w_t_p = jnp.pad(w.T, ((0, 0), (0, E - embed_dim))).astype(compute_dtype)

    # ---- H = seq @ W^T (small projection kernel, output kept in bf16) ----
    # W^T's block index is constant across the grid, so it stays resident in VMEM.
    # TODO(synk): if input_dim ever grows past ~8K, add K-tiling to this kernel too.
    proj_cost = pl.CostEstimate(
        flops=2 * Nk * input_dim * E,
        transcendentals=0,
        bytes_accessed=(seq_p.size + w_t_p.size) * 2 + Nk * E * 2)
    h = pl.pallas_call(
        _proj_kernel,
        out_shape=jax.ShapeDtypeStruct((Nk, E), compute_dtype),
        grid_spec=pltpu.PrefetchScalarGridSpec(
            num_scalar_prefetch=0,
            grid=(Nk // tk,),
            in_specs=[
                pl.BlockSpec((tk, input_dim), lambda i: (i, 0)),   # seq row tile
                pl.BlockSpec((input_dim, E), lambda i: (0, 0)),    # full (padded) W^T
            ],
            out_specs=pl.BlockSpec((tk, E), lambda i: (i, 0)),
        ),
        compiler_params=pltpu.CompilerParams(
            dimension_semantics=("parallel",),
            vmem_limit_bytes=48 * 1024 * 1024),
        cost_estimate=proj_cost,
    )(seq_p, w_t_p)

    # ---- out = ReLU(adj @ H), tiled (row tiles x contraction tiles) ----
    aggr_cost = pl.CostEstimate(
        flops=2 * Nr * Nk * E,
        transcendentals=0,
        bytes_accessed=adj_p.size * 2 + Nk * E * 2 + Nr * E * 4)
    out_p = pl.pallas_call(
        _aggr_kernel,
        out_shape=jax.ShapeDtypeStruct((Nr, E), out_dtype),
        grid_spec=pltpu.PrefetchScalarGridSpec(
            num_scalar_prefetch=0,
            grid=(Nr // tm, Nk // tk),                 # reduction axis last
            in_specs=[
                pl.BlockSpec((tm, tk), lambda i, k: (i, k)),   # adj tile
                pl.BlockSpec((tk, E), lambda i, k: (k, 0)),    # H tile
            ],
            out_specs=pl.BlockSpec((tm, E), lambda i, k: (i, 0)),
            scratch_shapes=[pltpu.VMEM((tm, E), jnp.float32)],
        ),
        compiler_params=pltpu.CompilerParams(
            dimension_semantics=("parallel", "arbitrary"),
            vmem_limit_bytes=48 * 1024 * 1024),
        cost_estimate=aggr_cost,
    )(adj_p, h)

    return out_p[:N, :embed_dim]


def xavier_uniform(key, shape):
    # torch.nn.init.xavier_uniform_ on nn.Linear.weight of shape (out, in)
    fan_out, fan_in = shape
    bound = math.sqrt(6.0 / (fan_in + fan_out))
    return jax.random.uniform(key, shape, jnp.float32, -bound, bound)


if __name__ == "__main__":
    # Small shapes consistent with the module's forward.
    N = 16            # number of nodes
    input_dim = 32
    embed_dim = 32

    key = jax.random.PRNGKey(0)
    k_seq, k_adj, k_w = jax.random.split(key, 3)

    seq = jax.random.normal(k_seq, (N, input_dim), jnp.float32)
    adj = jax.random.uniform(k_adj, (N, N), jnp.float32)       # dense adjacency
    # nn.Linear(input_dim, embed_dim, bias=False).weight has shape (embed_dim, input_dim)
    w = xavier_uniform(k_w, (embed_dim, input_dim))

    out = aggr_forward(seq, adj, w)
    jax.block_until_ready(out)

    # Reference check in plain JAX f32 (same math as the PyTorch forward).
    ref = jnp.maximum((adj @ seq) @ w.T, 0.0)
    assert out.shape == (N, embed_dim)
    # bf16 operands with f32 accumulation -> loosened tolerance vs. the pure-f32 ref.
    assert jnp.allclose(out, ref, atol=1e-1, rtol=1e-1), float(
        jnp.max(jnp.abs(out - ref)))

    print("KERNEL_OK")
</pallas_src>

<mosaic_0001>
module attributes {stable_mosaic.version = 11 : i64} {
  func.func @_proj_kernel(%arg0: i32, %arg1: memref<16x32xbf16, #tpu.memory_space<vmem>>, %arg2: memref<32x128xbf16, #tpu.memory_space<vmem>>, %arg3: memref<16x128xbf16, #tpu.memory_space<vmem>>) attributes {dimension_semantics = [#tpu.dimension_semantics<parallel>], iteration_bounds = array<i64: 1>, scalar_prefetch = 0 : i64, scratch_operands = 0 : i64, tpu.core_type = #tpu.core_type<tc>, window_params = [{transform_indices = @transform_0, window_bounds = array<i64: 16, 32>}, {pipeline_mode = #tpu.pipeline_mode<synchronous>, transform_indices = @transform_1, window_bounds = array<i64: 32, 128>}, {transform_indices = @transform_2, window_bounds = array<i64: 16, 128>}]} {
    %c0 = arith.constant 0 : index
    %c0_0 = arith.constant 0 : index
    %0 = vector.load %arg1[%c0, %c0_0] : memref<16x32xbf16, #tpu.memory_space<vmem>>, vector<16x32xbf16>
    %c0_1 = arith.constant 0 : index
    %c0_2 = arith.constant 0 : index
    %1 = vector.load %arg2[%c0_1, %c0_2] : memref<32x128xbf16, #tpu.memory_space<vmem>>, vector<32x128xbf16>
    %cst = arith.constant dense<0.000000e+00> : vector<16x128xf32>
    %2 = tpu.matmul %0, %1, %cst {dimension_numbers = #tpu.dot_dimension_numbers<[1], [0], [0], [1], [0, 0, 1, 1], [], []>} : vector<16x32xbf16>, vector<32x128xbf16>, vector<16x128xf32> -> vector<16x128xf32>
    %3 = arith.truncf %2 : vector<16x128xf32> to vector<16x128xbf16>
    %c0_3 = arith.constant 0 : index
    %c0_4 = arith.constant 0 : index
    %4 = vector.load %arg3[%c0_3, %c0_4] : memref<16x128xbf16, #tpu.memory_space<vmem>>, vector<16x128xbf16>
    tpu.vector_store %arg3[%c0_3, %c0_4], %3 {strides = array<i32>} : memref<16x128xbf16, #tpu.memory_space<vmem>>, vector<16x128xbf16>,
    return
  }
  func.func @transform_0(%arg0: i32) -> (i32, i32) {
    %c0_i32 = arith.constant 0 : i32
    %c0_i32_0 = arith.constant 0 : i32
    return %arg0, %c0_i32 : i32, i32
  }
  func.func @transform_1(%arg0: i32) -> (i32, i32) {
    %c0_i32 = arith.constant 0 : i32
    %c0_i32_0 = arith.constant 0 : i32
    %c0_i32_1 = arith.constant 0 : i32
    return %c0_i32, %c0_i32_0 : i32, i32
  }
  func.func @transform_2(%arg0: i32) -> (i32, i32) {
    %c0_i32 = arith.constant 0 : i32
    %c0_i32_0 = arith.constant 0 : i32
    return %arg0, %c0_i32 : i32, i32
  }
}

</mosaic_0001>

<llo_original>
// kernel: tpu_custom_call.1
$region0: #{tpu_custom_call.1}
  #allocation0 [shape = 'u32[]', space=smem, size = 0x4, offset = 0x4, fixed_abs, tag = 'smem constant byte address 0x4 - core index']
  #allocation1 [shape = 'u32[144,128]{1,0:T(1,128)}', space=vmem, size = 0x12000, scoped, tag = 'internal scratch']
  %s0 = inlined_call_operand.hbm [shape: bf16[16,32], index: 0, kind: input, shape index: {}]
  %s1 = inlined_call_operand.hbm [shape: bf16[32,128], index: 1, kind: input, shape index: {}]
  %s2 = inlined_call_operand.hbm [shape: bf16[16,128], index: 2, kind: output, shape index: {}]
  %s3 = sld [smem:[#allocation0]]
  $region26: #{tpu_custom_call.1} parent=0
    _
  %s5 = ssub.s32 1, %s3
  %s6 = scalar_select 0, %s5, %s3
  $region1: #{tpu_custom_call.1} parent=0
    #allocation2 [shape = 'u8[4096]{0}', space=vmem, size = 0x1000, scoped, tag = 'input window, operand 0, single buffered']
    #allocation3 [shape = 's32[1]{0}', space=sflag, size = 0x4, scoped, tag = 'scoped memory for tpu_custom_call.1']
    #allocation4 [shape = 's32[1]{0}', space=sflag, size = 0x4, scoped, tag = 'scoped memory for tpu_custom_call.1']
    #allocation5 [shape = 'u8[8192]{0}', space=vmem, size = 0x2000, scoped, tag = 'input window, operand 1, single buffered']
    #allocation6 [shape = 's32[1]{0}', space=sflag, size = 0x4, scoped, tag = 'scoped memory for tpu_custom_call.1']
    #allocation7 [shape = 'u8[4096]{0}', space=vmem, size = 0x1000, scoped, tag = 'output window, operand 0, single buffered']
    %7 = vsyncpa [#allocation3], 0
    %8 = vsyncpa [#allocation6], 0
    %9 = vsyncpa [#allocation4], 0
    // Predicated region
    $region2: #{tpu_custom_call.1} parent=1 // pred_check
      _
    $region3: #{tpu_custom_call.1} parent=1 // pred_check_branch
      %11 = sbr.rel (0) target = $region5
    $region4: #{tpu_custom_call.1} parent=1 // pred_region
      %s13 = ssub.s32 128, 128
      %14 = vsyncadd [#allocation3], %s13
      %s15 = sshll.u32 [#allocation2], 4
      %s16 = int_to_ptr.vmem [resolvable:$true] %s15
      %21 = dma.hbm_to_vmem [thread:$0]  %s0, 128, %s16, [#allocation3], 64, 64, 4
    $region5: #{tpu_custom_call.1} parent=1 // pred_fallthru
      _
    // Predicated region
    $region6: #{tpu_custom_call.1} parent=1 // pred_check
      _
    $region7: #{tpu_custom_call.1} parent=1 // pred_check_branch
      %23 = sbr.rel (0) target = $region9
    $region8: #{tpu_custom_call.1} parent=1 // pred_region
      %s25 = ssub.s32 256, 256
      %26 = vsyncadd [#allocation6], %s25
      %s27 = sshll.u32 [#allocation5], 4
      %s28 = int_to_ptr.vmem [resolvable:$true] %s27
      %33 = dma.hbm_to_vmem [thread:$0]  %s1, 256, %s28, [#allocation6], 64, 64, 4
    $region9: #{tpu_custom_call.1} parent=1 // pred_fallthru
      _
    // Predicated region
    $region10: #{tpu_custom_call.1} parent=1 // pred_check
      _
    $region11: #{tpu_custom_call.1} parent=1 // pred_check_branch
      %35 = sbr.rel (0) target = $region13
    $region12: #{tpu_custom_call.1} parent=1 // pred_region
      %36 = dma.done [#allocation3], 128
    $region13: #{tpu_custom_call.1} parent=1 // pred_fallthru
      _
    // Predicated region
    $region14: #{tpu_custom_call.1} parent=1 // pred_check
      _
    $region15: #{tpu_custom_call.1} parent=1 // pred_check_branch
      %38 = sbr.rel (0) target = $region17
    $region16: #{tpu_custom_call.1} parent=1 // pred_region
      %39 = dma.done [#allocation6], 256
    $region17: #{tpu_custom_call.1} parent=1 // pred_fallthru
      _
    %v41 = vld [vmem:[#allocation2] sm:$0xf]
    %v42 = vld [vmem:[#allocation2 + $0x4] sm:$0xf]
    %v43 = vld [vmem:[#allocation5] sm:$0xf]
    %v44 = vld [vmem:[#allocation5 + $0x4] sm:$0xf]
    %v45 = vld [vmem:[#allocation5 + $0x8] sm:$0xf]
    %v46 = vld [vmem:[#allocation5 + $0xc] sm:$0xf]
    %v49 = vunpack.c.l.b16 %v41
    %v50 = vunpack.c.l.b16 %v42
    %v51 = vpack.c.b16 %v50, %v49
    %v56 = vunpack.c.l.b16 %v43
    %v57 = vunpack.c.l.b16 %v44
    %v58 = vunpack.c.l.b16 %v45
    %v59 = vunpack.c.l.b16 %v46
    %v60 = vpack.c.b16 %v57, %v56
    %v61 = vpack.c.b16 %v59, %v58
    %vm64 = vcmask 261120
    %v66 = vsel %vm64, %v51, 0
    %68 = vmatprep.subr.bf16.mxu0 0
    %69 = vmatpush1.bf16.msra.mxu0 %v60
    %70 = vmatprep.subr.bf16.mxu0 0
    %71 = vmatpush1.bf16.msra.mxu0 %v61
    %72 = vmatprep.subr.bf16.mxu0 0
    %73 = vmatpush1.bf16.msra.mxu0 0
    %74 = vmatprep.subr.bf16.mxu0 0
    %75 = vmatpush1.bf16.msra.mxu0 0
    %76 = vmatprep.subr.bf16.mxu0 0
    %77 = vmatpush1.bf16.msra.mxu0 0
    %78 = vmatprep.subr.bf16.mxu0 0
    %79 = vmatpush1.bf16.msra.mxu0 0
    %80 = vmatprep.subr.bf16.mxu0 0
    %81 = vmatpush1.bf16.msra.mxu0 0
    %82 = vmatprep.subr.bf16.mxu0 0
    %83 = vmatpush1.bf16.msra.mxu0 0
    %84 = vmatprep.subr.bf16.mxu0 0
    %85 = vmatpush1.bf16.msra.mxu0 0
    %86 = vmatprep.subr.bf16.mxu0 0
    %87 = vmatpush1.bf16.msra.mxu0 0
    %88 = vmatprep.subr.bf16.mxu0 0
    %89 = vmatpush1.bf16.msra.mxu0 0
    %90 = vmatprep.subr.bf16.mxu0 0
    %91 = vmatpush1.bf16.msra.mxu0 0
    %92 = vmatprep.subr.bf16.mxu0 0
    %93 = vmatpush1.bf16.msra.mxu0 0
    %94 = vmatprep.subr.bf16.mxu0 0
    %95 = vmatpush1.bf16.msra.mxu0 0
    %96 = vmatprep.subr.bf16.mxu0 0
    %97 = vmatpush1.bf16.msra.mxu0 0
    %98 = vmatprep.subr.bf16.mxu0 0
    %99 = vmatpush1.bf16.msra.mxu0 0
    %100 = vmatprep.mubr.bf16.mxu0 0
    %101 = vmatmul.mubr.bf16.gmra.mrb[0].mxu0 %v66
    %v102 = vpop.f32.mrb[0].mxu0
    %v103 = vadd.f32 0.0, %v102
    %v104 = vpop.f32.mrb[0].mxu0
    %v105 = vpop.f32.mrb[0].mxu0
    %v106 = vadd.f32 0.0, %v105
    %v107 = vpop.f32.mrb[0].mxu0
    %108 = vdwg.mxu0
    %v109 = vpack.c.bf16 %v106, %v103
    %v111 = vunpack.c.l.b16 %v109
    %v112 = vunpack.c.h.b16 %v109
    %v113 = vpack.c.b16 %v111, %v111
    %v114 = vpack.c.b16 %v112, %v112
    %117 = vst [vmem:[#allocation7] sm:$0xf] %v113
    %118 = vst [vmem:[#allocation7 + $0x4] sm:$0xf] %v114
    // Predicated region
    $region18: #{tpu_custom_call.1} parent=1 // pred_check
      _
    $region19: #{tpu_custom_call.1} parent=1 // pred_check_branch
      %120 = sbr.rel (0) target = $region21
    $region20: #{tpu_custom_call.1} parent=1 // pred_region
      %s122 = ssub.s32 128, 128
      %123 = vsyncadd [#allocation4], %s122
      %s124 = sshll.u32 [#allocation7], 4
      %s125 = int_to_ptr.vmem [resolvable:$true] %s124
      %130 = dma.vmem_to_hbm [thread:$0]  %s125, 128, %s2, [#allocation4], 64, 64, 4
    $region21: #{tpu_custom_call.1} parent=1 // pred_fallthru
      _
    // Predicated region
    $region22: #{tpu_custom_call.1} parent=1 // pred_check
      _
    $region23: #{tpu_custom_call.1} parent=1 // pred_check_branch
      %132 = sbr.rel (0) target = $region25
    $region24: #{tpu_custom_call.1} parent=1 // pred_region
      %133 = dma.done [#allocation4], 128
    $region25: #{tpu_custom_call.1} parent=1 // pred_fallthru
      _
    %134 = vsyncpa [#allocation3], 1
    %135 = vsyncpa [#allocation6], 1
    %136 = vsyncpa [#allocation4], 1

</llo_original>
